<compile_context>
chip_gen: v5e
topology: v5e:2x2
jax: 0.10.0
libtpu: 0.0.40
codegen_flags: <defaults>
</compile_context>

<pallas_src>
import functools

import jax
import jax.numpy as jnp
from jax.experimental import pallas as pl
from jax.experimental.pallas import tpu as pltpu

_LANE = 128
_SUBLANE = 8


def _round_up(x, m):
    return ((x + m - 1) // m) * m


def _vmem_budget_bytes():
    """Per-generation VMEM budget for the full working set (tiles + params)."""
    try:
        cap = int(pltpu.get_tpu_info().vmem_capacity_bytes)
    except Exception:
        cap = 64 * 1024 * 1024  # conservative (v7x-sized) fallback
    if cap <= 64 * 1024 * 1024:       # v7x: 64 MiB physical per TensorCore
        return 40 * 1024 * 1024
    return 80 * 1024 * 1024           # v5e / v6e: 128 MiB physical


def prepare_qnetwork_params(weights, biases, param_dtype=None):
    """One-time padding/casting of parameters (hoisted out of the forward pass).

    weights: list of [in_dim, out_dim]  (transpose of the PyTorch nn.Linear layout)
    biases:  list of [out_dim]

    Padded layout (exactly reproduces the unpadded math: padded weight rows/cols
    and padded bias entries are zero, and ReLU(0) == 0):
      * layer 0 weight keeps its true K (= state_dim); only N is lane-padded,
      * hidden-layer weights are padded to multiples of 128 on both axes,
      * the final weight keeps its true N (= action_dim),
      * biases stay float32 and are padded to each layer's N.
    """
    num_layers = len(weights)
    dims = [int(weights[0].shape[0])] + [int(w.shape[1]) for w in weights]
    pdt = (jnp.dtype(param_dtype) if param_dtype is not None
           else jnp.dtype(weights[0].dtype))

    # Per-layer (K, N) in the padded parameter layout.
    k_dims = [dims[0]] + [_round_up(d, _LANE) for d in dims[1:-1]]
    n_dims = [_round_up(d, _LANE) for d in dims[1:-1]] + [dims[-1]]

    params = []
    for i in range(num_layers):
        in_d, out_d = int(weights[i].shape[0]), int(weights[i].shape[1])
        wp = (jnp.zeros((k_dims[i], n_dims[i]), pdt)
              .at[:in_d, :out_d].set(weights[i].astype(pdt)))
        bp = (jnp.zeros((1, n_dims[i]), jnp.float32)
              .at[:, :out_d].set(jnp.reshape(biases[i], (1, out_d)).astype(jnp.float32)))
        params.extend([wp, bp])
    return tuple(params)


def _qnetwork_kernel(num_layers, x_ref, *refs):
    """refs = (w0, b0, w1, b1, ..., w_{L-1}, b_{L-1}, out_ref)."""
    out_ref = refs[-1]
    param_refs = refs[:-1]

    compute_dtype = param_refs[0].dtype      # weights define the MXU operand dtype
    h = x_ref[...].astype(compute_dtype)     # (TB, state_dim) -- no padding needed
    for i in range(num_layers):
        w = param_refs[2 * i][...]           # [K_i, N_i]
        b = param_refs[2 * i + 1][...]       # [1, N_i], float32
        acc = jnp.dot(h, w, preferred_element_type=jnp.float32) + b
        if i < num_layers - 1:
            h = jnp.maximum(acc, 0.0).astype(compute_dtype)   # ReLU on hidden layers
        else:
            h = acc
    out_ref[...] = h.astype(out_ref.dtype)


@functools.partial(jax.jit, static_argnames=("block_batch", "out_dtype"))
def qnetwork_forward(x, params, *, block_batch=1024, out_dtype=jnp.float32):
    """Fused MLP forward.

    x:       [batch, state_dim]
    params:  output of prepare_qnetwork_params (padded weights + f32 biases)
    returns: [batch, action_dim] in out_dtype
    """
    num_layers = len(params) // 2
    batch, state_dim = x.shape
    weight_shapes = [params[2 * i].shape for i in range(num_layers)]
    action_dim = int(weight_shapes[-1][1])

    budget = _vmem_budget_bytes()
    param_bytes = sum(int(p.shape[0]) * int(p.shape[1]) * p.dtype.itemsize
                      for p in params)
    if 2 * param_bytes > budget - (4 << 20):
        # TODO(synk): add a K/N feature-tiled, weight-streaming variant for very
        # large hidden_dim (matters on v7x's 64 MiB VMEM); shrinking the batch
        # tile cannot reduce the parameter residency, so fail loudly here.
        raise ValueError("QNetwork parameters too large for the VMEM-resident scheme")

    # --- choose batch tile TB (multiple of 8 sublanes) under the VMEM budget ---
    max_feat = max([state_dim] + [int(s[1]) for s in weight_shapes])
    tb = _round_up(min(block_batch, max(batch, 1)), _SUBLANE)

    def vmem_est(t):
        io = 2 * t * state_dim * x.dtype.itemsize                   # x tiles (dbl-buf)
        io += 2 * t * action_dim * jnp.dtype(out_dtype).itemsize    # out tiles (dbl-buf)
        act = 3 * t * max_feat * 4                                  # in-flight f32 acts
        return io + act + 2 * param_bytes                           # resident params

    while tb > _SUBLANE and vmem_est(tb) > budget:
        tb = _round_up(max(tb // 2, _SUBLANE), _SUBLANE)

    # v7x megacore: split the batch across the two TensorCores only when there is
    # enough work per tile to amortize the extra grid step.
    if batch >= 4096 and tb >= batch:
        tb = _round_up(pl.cdiv(batch, 2), _SUBLANE)

    grid_b = pl.cdiv(batch, tb)
    pbatch = grid_b * tb
    # Only a tiny sublane-direction row pad when batch does not divide TB; no lane
    # padding of the input is ever materialized.
    x_in = x if pbatch == batch else jnp.pad(x, ((0, pbatch - batch), (0, 0)))

    in_specs = [pl.BlockSpec((tb, state_dim), lambda b: (b, 0))]
    for i in range(num_layers):
        kw, nw = int(weight_shapes[i][0]), int(weight_shapes[i][1])
        # Whole-array blocks with constant index_map -> VMEM-resident across steps.
        in_specs.append(pl.BlockSpec((kw, nw), lambda b: (0, 0)))
        in_specs.append(pl.BlockSpec((1, nw), lambda b: (0, 0)))

    out_spec = pl.BlockSpec((tb, action_dim), lambda b: (b, 0))

    out = pl.pallas_call(
        functools.partial(_qnetwork_kernel, num_layers),
        out_shape=jax.ShapeDtypeStruct((pbatch, action_dim), out_dtype),
        grid=(grid_b,),
        in_specs=in_specs,
        out_specs=out_spec,
        compiler_params=pltpu.CompilerParams(
            dimension_semantics=("parallel",),
            vmem_limit_bytes=budget,
        ),
    )(x_in, *params)

    return out if pbatch == batch else out[:batch]


def init_qnetwork_params(key, state_dim, action_dim, hidden_dim, num_layers):
    """Deterministic init mimicking PyTorch nn.Linear (U[-1/sqrt(fan_in), +])."""
    dims = [state_dim] + [hidden_dim] * (num_layers - 1) + [action_dim]
    weights, biases = [], []
    for i in range(num_layers):
        fan_in, fan_out = dims[i], dims[i + 1]
        key, wk, bk = jax.random.split(key, 3)
        bound = 1.0 / (fan_in ** 0.5)
        # Stored as [in_dim, out_dim] (transpose of the PyTorch layout).
        w = jax.random.uniform(wk, (fan_in, fan_out), jnp.float32, -bound, bound)
        b = jax.random.uniform(bk, (fan_out,), jnp.float32, -bound, bound)
        weights.append(w)
        biases.append(b)
    return weights, biases


def qnetwork_reference(x, weights, biases):
    """Pure-JAX reference of the same forward pass."""
    h = x
    n = len(weights)
    for i, (w, b) in enumerate(zip(weights, biases)):
        h = h @ w + jnp.reshape(b, (1, -1))
        if i < n - 1:
            h = jnp.maximum(h, 0.0)
    return h


if __name__ == "__main__":
    # Shapes consistent with QNetwork(state_dim, action_dim, hidden_dim, num_layers).
    batch = 64
    state_dim = 16
    action_dim = 4
    hidden_dim = 32
    num_layers = 3  # Linear(16->32) ReLU, Linear(32->32) ReLU, Linear(32->4)

    key = jax.random.PRNGKey(0)
    key, xk = jax.random.split(key)
    x = jax.random.normal(xk, (batch, state_dim), jnp.float32)

    weights, biases = init_qnetwork_params(
        key, state_dim, action_dim, hidden_dim, num_layers
    )

    # One-time parameter preparation (f32 params keep exact parity with the
    # reference; pass param_dtype=jnp.bfloat16 on v6e/v7x for full MXU rate,
    # with a correspondingly looser tolerance).
    params = prepare_qnetwork_params(weights, biases)
    ref = qnetwork_reference(x, weights, biases)

    # Default call: single-tile launch (grid=(1,)) -- the latency floor.
    out = jax.block_until_ready(qnetwork_forward(x, params))
    assert out.shape == (batch, action_dim)
    assert jnp.allclose(out, ref, atol=1e-5, rtol=1e-5)

    # Also exercise the batch-tiled / pipelined path (grid=(2,)) for correctness.
    out_tiled = jax.block_until_ready(qnetwork_forward(x, params, block_batch=32))
    assert jnp.allclose(out_tiled, ref, atol=1e-5, rtol=1e-5)

    print("KERNEL_OK")
</pallas_src>

<mosaic_0001>
module attributes {stable_mosaic.version = 11 : i64} {
  func.func @_qnetwork_kernel(%arg0: i32, %arg1: memref<64x16xf32, #tpu.memory_space<vmem>>, %arg2: memref<16x128xf32, #tpu.memory_space<vmem>>, %arg3: memref<1x128xf32, #tpu.memory_space<vmem>>, %arg4: memref<128x128xf32, #tpu.memory_space<vmem>>, %arg5: memref<1x128xf32, #tpu.memory_space<vmem>>, %arg6: memref<128x4xf32, #tpu.memory_space<vmem>>, %arg7: memref<1x4xf32, #tpu.memory_space<vmem>>, %arg8: memref<64x4xf32, #tpu.memory_space<vmem>>) attributes {dimension_semantics = [#tpu.dimension_semantics<parallel>], iteration_bounds = array<i64: 1>, scalar_prefetch = 0 : i64, scratch_operands = 0 : i64, tpu.core_type = #tpu.core_type<tc>, window_params = [{transform_indices = @transform_0, window_bounds = array<i64: 64, 16>}, {pipeline_mode = #tpu.pipeline_mode<synchronous>, transform_indices = @transform_1, window_bounds = array<i64: 16, 128>}, {pipeline_mode = #tpu.pipeline_mode<synchronous>, transform_indices = @transform_2, window_bounds = array<i64: 1, 128>}, {pipeline_mode = #tpu.pipeline_mode<synchronous>, transform_indices = @transform_3, window_bounds = array<i64: 128, 128>}, {pipeline_mode = #tpu.pipeline_mode<synchronous>, transform_indices = @transform_4, window_bounds = array<i64: 1, 128>}, {pipeline_mode = #tpu.pipeline_mode<synchronous>, transform_indices = @transform_5, window_bounds = array<i64: 128, 4>}, {pipeline_mode = #tpu.pipeline_mode<synchronous>, transform_indices = @transform_6, window_bounds = array<i64: 1, 4>}, {transform_indices = @transform_7, window_bounds = array<i64: 64, 4>}]} {
    %c0 = arith.constant 0 : index
    %c0_0 = arith.constant 0 : index
    %0 = vector.load %arg1[%c0, %c0_0] : memref<64x16xf32, #tpu.memory_space<vmem>>, vector<64x16xf32>
    %c0_1 = arith.constant 0 : index
    %c0_2 = arith.constant 0 : index
    %1 = vector.load %arg2[%c0_1, %c0_2] : memref<16x128xf32, #tpu.memory_space<vmem>>, vector<16x128xf32>
    %c0_3 = arith.constant 0 : index
    %c0_4 = arith.constant 0 : index
    %2 = vector.load %arg3[%c0_3, %c0_4] : memref<1x128xf32, #tpu.memory_space<vmem>>, vector<1x128xf32>
    %cst = arith.constant dense<0.000000e+00> : vector<64x128xf32>
    %3 = tpu.matmul %0, %1, %cst {dimension_numbers = #tpu.dot_dimension_numbers<[1], [0], [0], [1], [0, 0, 1, 1], [], []>} : vector<64x16xf32>, vector<16x128xf32>, vector<64x128xf32> -> vector<64x128xf32>
    %4 = vector.broadcast %2 : vector<1x128xf32> to vector<64x128xf32>
    %5 = arith.addf %3, %4 : vector<64x128xf32>
    %cst_5 = arith.constant 0.000000e+00 : f32
    %6 = vector.broadcast %cst_5 : f32 to vector<64x128xf32>
    %7 = arith.maximumf %5, %6 : vector<64x128xf32>
    %c0_6 = arith.constant 0 : index
    %c0_7 = arith.constant 0 : index
    %8 = vector.load %arg4[%c0_6, %c0_7] : memref<128x128xf32, #tpu.memory_space<vmem>>, vector<128x128xf32>
    %c0_8 = arith.constant 0 : index
    %c0_9 = arith.constant 0 : index
    %9 = vector.load %arg5[%c0_8, %c0_9] : memref<1x128xf32, #tpu.memory_space<vmem>>, vector<1x128xf32>
    %cst_10 = arith.constant dense<0.000000e+00> : vector<64x128xf32>
    %10 = tpu.matmul %7, %8, %cst_10 {dimension_numbers = #tpu.dot_dimension_numbers<[1], [0], [0], [1], [0, 0, 1, 1], [], []>} : vector<64x128xf32>, vector<128x128xf32>, vector<64x128xf32> -> vector<64x128xf32>
    %11 = vector.broadcast %9 : vector<1x128xf32> to vector<64x128xf32>
    %12 = arith.addf %10, %11 : vector<64x128xf32>
    %cst_11 = arith.constant 0.000000e+00 : f32
    %13 = vector.broadcast %cst_11 : f32 to vector<64x128xf32>
    %14 = arith.maximumf %12, %13 : vector<64x128xf32>
    %c0_12 = arith.constant 0 : index
    %c0_13 = arith.constant 0 : index
    %15 = vector.load %arg6[%c0_12, %c0_13] : memref<128x4xf32, #tpu.memory_space<vmem>>, vector<128x4xf32>
    %c0_14 = arith.constant 0 : index
    %c0_15 = arith.constant 0 : index
    %16 = vector.load %arg7[%c0_14, %c0_15] : memref<1x4xf32, #tpu.memory_space<vmem>>, vector<1x4xf32>
    %cst_16 = arith.constant dense<0.000000e+00> : vector<64x4xf32>
    %17 = tpu.matmul %14, %15, %cst_16 {dimension_numbers = #tpu.dot_dimension_numbers<[1], [0], [0], [1], [0, 0, 1, 1], [], []>} : vector<64x128xf32>, vector<128x4xf32>, vector<64x4xf32> -> vector<64x4xf32>
    %18 = vector.broadcast %16 : vector<1x4xf32> to vector<64x4xf32>
    %19 = arith.addf %17, %18 : vector<64x4xf32>
    %c0_17 = arith.constant 0 : index
    %c0_18 = arith.constant 0 : index
    %20 = vector.load %arg8[%c0_17, %c0_18] : memref<64x4xf32, #tpu.memory_space<vmem>>, vector<64x4xf32>
    tpu.vector_store %arg8[%c0_17, %c0_18], %19 {strides = array<i32>} : memref<64x4xf32, #tpu.memory_space<vmem>>, vector<64x4xf32>,
    return
  }
  func.func @transform_0(%arg0: i32) -> (i32, i32) {
    %c0_i32 = arith.constant 0 : i32
    %c0_i32_0 = arith.constant 0 : i32
    return %arg0, %c0_i32 : i32, i32
  }
  func.func @transform_1(%arg0: i32) -> (i32, i32) {
    %c0_i32 = arith.constant 0 : i32
    %c0_i32_0 = arith.constant 0 : i32
    %c0_i32_1 = arith.constant 0 : i32
    return %c0_i32, %c0_i32_0 : i32, i32
  }
  func.func @transform_2(%arg0: i32) -> (i32, i32) {
    %c0_i32 = arith.constant 0 : i32
    %c0_i32_0 = arith.constant 0 : i32
    %c0_i32_1 = arith.constant 0 : i32
    return %c0_i32, %c0_i32_0 : i32, i32
  }
  func.func @transform_3(%arg0: i32) -> (i32, i32) {
    %c0_i32 = arith.constant 0 : i32
    %c0_i32_0 = arith.constant 0 : i32
    %c0_i32_1 = arith.constant 0 : i32
    return %c0_i32, %c0_i32_0 : i32, i32
  }
  func.func @transform_4(%arg0: i32) -> (i32, i32) {
    %c0_i32 = arith.constant 0 : i32
    %c0_i32_0 = arith.constant 0 : i32
    %c0_i32_1 = arith.constant 0 : i32
    return %c0_i32, %c0_i32_0 : i32, i32
  }
  func.func @transform_5(%arg0: i32) -> (i32, i32) {
    %c0_i32 = arith.constant 0 : i32
    %c0_i32_0 = arith.constant 0 : i32
    %c0_i32_1 = arith.constant 0 : i32
    return %c0_i32, %c0_i32_0 : i32, i32
  }
  func.func @transform_6(%arg0: i32) -> (i32, i32) {
    %c0_i32 = arith.constant 0 : i32
    %c0_i32_0 = arith.constant 0 : i32
    %c0_i32_1 = arith.constant 0 : i32
    return %c0_i32, %c0_i32_0 : i32, i32
  }
  func.func @transform_7(%arg0: i32) -> (i32, i32) {
    %c0_i32 = arith.constant 0 : i32
    %c0_i32_0 = arith.constant 0 : i32
    return %arg0, %c0_i32 : i32, i32
  }
}

</mosaic_0001>

<llo_original>
// kernel: qnetwork_forward.1
$region0: #{qnetwork_forward.1}
  #allocation0 [shape = 'u32[]', space=smem, size = 0x4, offset = 0x4, fixed_abs, tag = 'smem constant byte address 0x4 - core index']
  #allocation1 [shape = 'u32[72,128]{1,0:T(1,128)}', space=vmem, size = 0x9000, scoped, tag = 'internal scratch']
  %s0 = inlined_call_operand.vmem [shape: f32[64,16], index: 0, kind: input, shape index: {}]
  %s1 = inlined_call_operand.vmem [shape: f32[16,128], index: 1, kind: input, shape index: {}]
  %s2 = inlined_call_operand.vmem [shape: f32[1,128], index: 2, kind: input, shape index: {}]
  %s3 = inlined_call_operand.vmem [shape: f32[128,128], index: 3, kind: input, shape index: {}]
  %s4 = inlined_call_operand.vmem [shape: f32[1,128], index: 4, kind: input, shape index: {}]
  %s5 = inlined_call_operand.vmem [shape: f32[128,4], index: 5, kind: input, shape index: {}]
  %s6 = inlined_call_operand.vmem [shape: f32[1,4], index: 6, kind: input, shape index: {}]
  %s7 = inlined_call_operand.vmem [shape: f32[64,4], index: 7, kind: output, shape index: {}]
  %s8 = sld [smem:[#allocation0]]
  $region38: #{qnetwork_forward.1} parent=0
    _
  %s10 = ssub.s32 1, %s8
  %s11 = scalar_select 0, %s10, %s8
  // Predicated region
  $region2: #{qnetwork_forward.1} parent=0 // pred_check
    _
  $region3: #{qnetwork_forward.1} parent=0 // pred_check_branch
    %13 = sbr.rel (0) target = $region5
  $region4: #{qnetwork_forward.1} parent=0 // pred_region
    _
  $region5: #{qnetwork_forward.1} parent=0 // pred_fallthru
    _
  // Predicated region
  $region6: #{qnetwork_forward.1} parent=0 // pred_check
    _
  $region7: #{qnetwork_forward.1} parent=0 // pred_check_branch
    %15 = sbr.rel (0) target = $region9
  $region8: #{qnetwork_forward.1} parent=0 // pred_region
    _
  $region9: #{qnetwork_forward.1} parent=0 // pred_fallthru
    _
  // Predicated region
  $region10: #{qnetwork_forward.1} parent=0 // pred_check
    _
  $region11: #{qnetwork_forward.1} parent=0 // pred_check_branch
    %17 = sbr.rel (0) target = $region13
  $region12: #{qnetwork_forward.1} parent=0 // pred_region
    _
  $region13: #{qnetwork_forward.1} parent=0 // pred_fallthru
    _
  // Predicated region
  $region14: #{qnetwork_forward.1} parent=0 // pred_check
    _
  $region15: #{qnetwork_forward.1} parent=0 // pred_check_branch
    %19 = sbr.rel (0) target = $region17
  $region16: #{qnetwork_forward.1} parent=0 // pred_region
    _
  $region17: #{qnetwork_forward.1} parent=0 // pred_fallthru
    _
  // Predicated region
  $region18: #{qnetwork_forward.1} parent=0 // pred_check
    _
  $region19: #{qnetwork_forward.1} parent=0 // pred_check_branch
    %21 = sbr.rel (0) target = $region21
  $region20: #{qnetwork_forward.1} parent=0 // pred_region
    _
  $region21: #{qnetwork_forward.1} parent=0 // pred_fallthru
    _
  // Predicated region
  $region22: #{qnetwork_forward.1} parent=0 // pred_check
    _
  $region23: #{qnetwork_forward.1} parent=0 // pred_check_branch
    %23 = sbr.rel (0) target = $region25
  $region24: #{qnetwork_forward.1} parent=0 // pred_region
    _
  $region25: #{qnetwork_forward.1} parent=0 // pred_fallthru
    _
  // Predicated region
  $region26: #{qnetwork_forward.1} parent=0 // pred_check
    _
  $region27: #{qnetwork_forward.1} parent=0 // pred_check_branch
    %25 = sbr.rel (0) target = $region29
  $region28: #{qnetwork_forward.1} parent=0 // pred_region
    _
  $region29: #{qnetwork_forward.1} parent=0 // pred_fallthru
    _
  %v26 = vld [vmem:[%s0] sm:$0xff]
  %v27 = vld [vmem:[%s0 + $0x8] sm:$0xff]
  %v28 = vld [vmem:[%s0 + $0x10] sm:$0xff]
  %v29 = vld [vmem:[%s0 + $0x18] sm:$0xff]
  %v30 = vld [vmem:[%s0 + $0x20] sm:$0xff]
  %v31 = vld [vmem:[%s0 + $0x28] sm:$0xff]
  %v32 = vld [vmem:[%s0 + $0x30] sm:$0xff]
  %v33 = vld [vmem:[%s0 + $0x38] sm:$0xff]
  %v34 = vld [vmem:[%s1] sm:$0xff]
  %v35 = vld [vmem:[%s1 + $0x8] sm:$0xff]
  %v36 = vld [vmem:[%s2] sm:$0x1]
  %v38 = vperm.slane %v36, 0
  %vm40 = vcmask 130048
  %v42 = vsel %vm40, %v26, 0
  %v45 = vsel %vm40, %v27, 0
  %v48 = vsel %vm40, %v28, 0
  %v51 = vsel %vm40, %v29, 0
  %v54 = vsel %vm40, %v30, 0
  %v57 = vsel %vm40, %v31, 0
  %v60 = vsel %vm40, %v32, 0
  %v63 = vsel %vm40, %v33, 0
  %65 = vmatpush.msra.mxu0 0.0
  %66 = vmatpush.msra.mxu0 0.0
  %67 = vmatpush.msra.mxu0 0.0
  %68 = vmatpush.msra.mxu0 0.0
  %69 = vmatpush.msra.mxu0 0.0
  %70 = vmatpush.msra.mxu0 0.0
  %71 = vmatpush.msra.mxu0 0.0
  %72 = vmatpush.msra.mxu0 0.0
  %73 = vmatpush.msra.mxu0 0.0
  %74 = vmatpush.msra.mxu0 0.0
  %75 = vmatpush.msra.mxu0 0.0
  %76 = vmatpush.msra.mxu0 0.0
  %77 = vmatpush.msra.mxu0 0.0
  %78 = vmatpush.msra.mxu0 0.0
  %79 = vmatpush.msra.mxu0 %v35
  %80 = vmatpush.msra.mxu0 %v34
  %81 = vmatmul.f32.gmra.mxu0 %v42
  %v82 = vpop.f32.mrf.mxu0
  %v83 = vadd.f32 %v38, %v82
  %84 = vmatmul.f32.gmra.mxu0 %v45
  %v85 = vpop.f32.mrf.mxu0
  %v86 = vadd.f32 %v38, %v85
  %87 = vmatmul.f32.gmra.mxu0 %v48
  %v88 = vpop.f32.mrf.mxu0
  %v89 = vadd.f32 %v38, %v88
  %90 = vmatmul.f32.gmra.mxu0 %v51
  %v91 = vpop.f32.mrf.mxu0
  %v92 = vadd.f32 %v38, %v91
  %93 = vmatmul.f32.gmra.mxu0 %v54
  %v94 = vpop.f32.mrf.mxu0
  %v95 = vadd.f32 %v38, %v94
  %96 = vmatmul.f32.gmra.mxu0 %v57
  %v97 = vpop.f32.mrf.mxu0
  %v98 = vadd.f32 %v38, %v97
  %99 = vmatmul.f32.gmra.mxu0 %v60
  %v100 = vpop.f32.mrf.mxu0
  %v101 = vadd.f32 %v38, %v100
  %102 = vmatmul.f32.gmra.mxu0 %v63
  %v103 = vpop.f32.mrf.mxu0
  %v104 = vadd.f32 %v38, %v103
  %105 = vdwg.mxu0
  %v106 = vmax.f32 %v83, 0.0
  %v107 = vmax.f32 %v86, 0.0
  %v108 = vmax.f32 %v89, 0.0
  %v109 = vmax.f32 %v92, 0.0
  %v110 = vmax.f32 %v95, 0.0
  %v111 = vmax.f32 %v98, 0.0
  %v112 = vmax.f32 %v101, 0.0
  %v113 = vmax.f32 %v104, 0.0
  %v114 = vld [vmem:[%s3] sm:$0xff]
  %v115 = vld [vmem:[%s3 + $0x8] sm:$0xff]
  %v116 = vld [vmem:[%s3 + $0x10] sm:$0xff]
  %v117 = vld [vmem:[%s3 + $0x18] sm:$0xff]
  %v118 = vld [vmem:[%s3 + $0x20] sm:$0xff]
  %v119 = vld [vmem:[%s3 + $0x28] sm:$0xff]
  %v120 = vld [vmem:[%s3 + $0x30] sm:$0xff]
  %v121 = vld [vmem:[%s3 + $0x38] sm:$0xff]
  %v122 = vld [vmem:[%s3 + $0x40] sm:$0xff]
  %v123 = vld [vmem:[%s3 + $0x48] sm:$0xff]
  %v124 = vld [vmem:[%s3 + $0x50] sm:$0xff]
  %v125 = vld [vmem:[%s3 + $0x58] sm:$0xff]
  %v126 = vld [vmem:[%s3 + $0x60] sm:$0xff]
  %v127 = vld [vmem:[%s3 + $0x68] sm:$0xff]
  %v128 = vld [vmem:[%s3 + $0x70] sm:$0xff]
  %v129 = vld [vmem:[%s3 + $0x78] sm:$0xff]
  %v130 = vld [vmem:[%s4] sm:$0x1]
  %v132 = vperm.slane %v130, 0
  %134 = vmatpush.msra.mxu0 %v129
  %135 = vmatpush.msra.mxu0 %v128
  %136 = vmatpush.msra.mxu0 %v127
  %137 = vmatpush.msra.mxu0 %v126
  %138 = vmatpush.msra.mxu0 %v125
  %139 = vmatpush.msra.mxu0 %v124
  %140 = vmatpush.msra.mxu0 %v123
  %141 = vmatpush.msra.mxu0 %v122
  %142 = vmatpush.msra.mxu0 %v121
  %143 = vmatpush.msra.mxu0 %v120
  %144 = vmatpush.msra.mxu0 %v119
  %145 = vmatpush.msra.mxu0 %v118
  %146 = vmatpush.msra.mxu0 %v117
  %147 = vmatpush.msra.mxu0 %v116
  %148 = vmatpush.msra.mxu0 %v115
  %149 = vmatpush.msra.mxu0 %v114
  %150 = vmatmul.f32.gmra.mxu0 %v106
  %v151 = vpop.f32.mrf.mxu0
  %v152 = vadd.f32 %v132, %v151
  %153 = vmatmul.f32.gmra.mxu0 %v107
  %v154 = vpop.f32.mrf.mxu0
  %v155 = vadd.f32 %v132, %v154
  %156 = vmatmul.f32.gmra.mxu0 %v108
  %v157 = vpop.f32.mrf.mxu0
  %v158 = vadd.f32 %v132, %v157
  %159 = vmatmul.f32.gmra.mxu0 %v109
  %v160 = vpop.f32.mrf.mxu0
  %v161 = vadd.f32 %v132, %v160
  %162 = vmatmul.f32.gmra.mxu0 %v110
  %v163 = vpop.f32.mrf.mxu0
  %v164 = vadd.f32 %v132, %v163
  %165 = vmatmul.f32.gmra.mxu0 %v111
  %v166 = vpop.f32.mrf.mxu0
  %v167 = vadd.f32 %v132, %v166
  %168 = vmatmul.f32.gmra.mxu0 %v112
  %v169 = vpop.f32.mrf.mxu0
  %v170 = vadd.f32 %v132, %v169
  %171 = vmatmul.f32.gmra.mxu0 %v113
  %v172 = vpop.f32.mrf.mxu0
  %v173 = vadd.f32 %v132, %v172
  %174 = vdwg.mxu0
  %v175 = vmax.f32 %v152, 0.0
  %v176 = vmax.f32 %v155, 0.0
  %v177 = vmax.f32 %v158, 0.0
  %v178 = vmax.f32 %v161, 0.0
  %v179 = vmax.f32 %v164, 0.0
  %v180 = vmax.f32 %v167, 0.0
  %v181 = vmax.f32 %v170, 0.0
  %v182 = vmax.f32 %v173, 0.0
  %v183 = vld [vmem:[%s5] sm:$0xff]
  %v184 = vld [vmem:[%s5 + $0x8] sm:$0xff]
  %v185 = vld [vmem:[%s5 + $0x10] sm:$0xff]
  %v186 = vld [vmem:[%s5 + $0x18] sm:$0xff]
  %v187 = vld [vmem:[%s5 + $0x20] sm:$0xff]
  %v188 = vld [vmem:[%s5 + $0x28] sm:$0xff]
  %v189 = vld [vmem:[%s5 + $0x30] sm:$0xff]
  %v190 = vld [vmem:[%s5 + $0x38] sm:$0xff]
  %v191 = vld [vmem:[%s5 + $0x40] sm:$0xff]
  %v192 = vld [vmem:[%s5 + $0x48] sm:$0xff]
  %v193 = vld [vmem:[%s5 + $0x50] sm:$0xff]
  %v194 = vld [vmem:[%s5 + $0x58] sm:$0xff]
  %v195 = vld [vmem:[%s5 + $0x60] sm:$0xff]
  %v196 = vld [vmem:[%s5 + $0x68] sm:$0xff]
  %v197 = vld [vmem:[%s5 + $0x70] sm:$0xff]
  %v198 = vld [vmem:[%s5 + $0x78] sm:$0xff]
  %v199 = vld [vmem:[%s6] sm:$0x1]
  %v201 = vperm.slane %v199, 0
  %203 = vmatpush.msra.mxu0 %v198
  %204 = vmatpush.msra.mxu0 %v197
  %205 = vmatpush.msra.mxu0 %v196
  %206 = vmatpush.msra.mxu0 %v195
  %207 = vmatpush.msra.mxu0 %v194
  %208 = vmatpush.msra.mxu0 %v193
  %209 = vmatpush.msra.mxu0 %v192
  %210 = vmatpush.msra.mxu0 %v191
  %211 = vmatpush.msra.mxu0 %v190
  %212 = vmatpush.msra.mxu0 %v189
  %213 = vmatpush.msra.mxu0 %v188
  %214 = vmatpush.msra.mxu0 %v187
  %215 = vmatpush.msra.mxu0 %v186
  %216 = vmatpush.msra.mxu0 %v185
  %217 = vmatpush.msra.mxu0 %v184
  %218 = vmatpush.msra.mxu0 %v183
  %219 = vmatmul.f32.gmra.mxu0 %v175
  %v220 = vpop.f32.mrf.mxu0
  %v221 = vadd.f32 %v201, %v220
  %222 = vmatmul.f32.gmra.mxu0 %v176
  %v223 = vpop.f32.mrf.mxu0
  %v224 = vadd.f32 %v201, %v223
  %225 = vmatmul.f32.gmra.mxu0 %v177
  %v226 = vpop.f32.mrf.mxu0
  %v227 = vadd.f32 %v201, %v226
  %228 = vmatmul.f32.gmra.mxu0 %v178
  %v229 = vpop.f32.mrf.mxu0
  %v230 = vadd.f32 %v201, %v229
  %231 = vmatmul.f32.gmra.mxu0 %v179
  %v232 = vpop.f32.mrf.mxu0
  %v233 = vadd.f32 %v201, %v232
  %234 = vmatmul.f32.gmra.mxu0 %v180
  %v235 = vpop.f32.mrf.mxu0
  %v236 = vadd.f32 %v201, %v235
  %237 = vmatmul.f32.gmra.mxu0 %v181
  %v238 = vpop.f32.mrf.mxu0
  %v239 = vadd.f32 %v201, %v238
  %240 = vmatmul.f32.gmra.mxu0 %v182
  %v241 = vpop.f32.mrf.mxu0
  %v242 = vadd.f32 %v201, %v241
  %243 = vdwg.mxu0
  %vm244 = vcmask 31744
  %245 = vst.msk [vmem:[%s7] sm:$0xff] %vm244, %v221
  %246 = vst.msk [vmem:[%s7 + $0x8] sm:$0xff] %vm244, %v224
  %247 = vst.msk [vmem:[%s7 + $0x10] sm:$0xff] %vm244, %v227
  %248 = vst.msk [vmem:[%s7 + $0x18] sm:$0xff] %vm244, %v230
  %249 = vst.msk [vmem:[%s7 + $0x20] sm:$0xff] %vm244, %v233
  %250 = vst.msk [vmem:[%s7 + $0x28] sm:$0xff] %vm244, %v236
  %251 = vst.msk [vmem:[%s7 + $0x30] sm:$0xff] %vm244, %v239
  %252 = vst.msk [vmem:[%s7 + $0x38] sm:$0xff] %vm244, %v242
  // Predicated region
  $region30: #{qnetwork_forward.1} parent=0 // pred_check
    _
  $region31: #{qnetwork_forward.1} parent=0 // pred_check_branch
    %254 = sbr.rel (0) target = $region33
  $region32: #{qnetwork_forward.1} parent=0 // pred_region
    _
  $region33: #{qnetwork_forward.1} parent=0 // pred_fallthru
    _
  // Predicated region
  $region34: #{qnetwork_forward.1} parent=0 // pred_check
    _
  $region35: #{qnetwork_forward.1} parent=0 // pred_check_branch
    %256 = sbr.rel (0) target = $region37
  $region36: #{qnetwork_forward.1} parent=0 // pred_region
    _
  $region37: #{qnetwork_forward.1} parent=0 // pred_fallthru
    _

</llo_original>
